<compile_context>
chip_gen: v5e
topology: v5e:2x2
jax: 0.10.0
libtpu: 0.0.40
codegen_flags: <defaults>
</compile_context>

<pallas_src>
import math
import functools

import jax
import jax.numpy as jnp
from jax.experimental import pallas as pl
from jax.experimental.pallas import tpu as pltpu


def _posenc_kernel(x_ref, pe_ref, o_ref, *, batch):
    # x_ref: (tS, B*D), pe_ref: (tS, D) -> broadcast PE across batch on-chip.
    pe_b = jnp.tile(pe_ref[...], (1, batch))            # (tS, B*D)
    o_ref[...] = (x_ref[...] + pe_b).astype(o_ref.dtype)


def _posenc_dropout_kernel(x_ref, pe_ref, mask_ref, o_ref, *, batch):
    # mask_ref holds 0 or 1/(1-p) (inverted dropout), same dtype/layout as x.
    pe_b = jnp.tile(pe_ref[...], (1, batch))            # (tS, B*D)
    o_ref[...] = ((x_ref[...] + pe_b) * mask_ref[...]).astype(o_ref.dtype)


def make_pe(d_model: int, max_len: int = 5000, dtype=jnp.float32):
    """Deterministic positional-encoding table, shape [max_len, d_model]."""
    position = jnp.arange(max_len, dtype=jnp.float32)[:, None]             # (L, 1)
    div_term = jnp.exp(jnp.arange(0, d_model, 2, dtype=jnp.float32)
                       * (-math.log(10000.0) / d_model))                   # (D/2,)
    pe = jnp.zeros((max_len, d_model), dtype=jnp.float32)
    pe = pe.at[:, 0::2].set(jnp.sin(position * div_term))
    pe = pe.at[:, 1::2].set(jnp.cos(position * div_term))
    return pe.astype(dtype)


def positional_encoding(x, pe, *, p: float = 0.1, training: bool = False,
                        rng_key=None, seq_tile: int = 512):
    """x: [S, B, D]. pe: [max_len, D] table. Returns [S, B, D] (same dtype as x)."""
    S, B, D = x.shape
    pe_slice = pe[:S].astype(x.dtype)                   # (S, D), no dtype promotion in-kernel
    x2d = x.reshape(S, B * D)                           # free, contiguous reshape

    # Sequence-axis tile: multiple of 8 (sublane rule) unless it covers all of S.
    tS = min(S, int(seq_tile))
    if tS != S:
        tS = max(8, (tS // 8) * 8)
    grid = (pl.cdiv(S, tS),)

    in_specs = [
        pl.BlockSpec((tS, B * D), lambda i: (i, 0)),    # x tile
        pl.BlockSpec((tS, D), lambda i: (i, 0)),        # pe tile (1/B the bytes of x)
    ]
    inputs = [x2d, pe_slice]

    if training and p > 0.0:
        if rng_key is None:
            rng_key = jax.random.PRNGKey(0)
        keep = jax.random.bernoulli(rng_key, 1.0 - p, shape=(S, B * D))
        scale = jnp.asarray(1.0 / (1.0 - p), dtype=x.dtype)
        mask = keep.astype(x.dtype) * scale             # 0 or 1/(1-p)
        in_specs.append(pl.BlockSpec((tS, B * D), lambda i: (i, 0)))
        inputs.append(mask)
        kernel = functools.partial(_posenc_dropout_kernel, batch=B)
    else:
        kernel = functools.partial(_posenc_kernel, batch=B)

    out2d = pl.pallas_call(
        kernel,
        out_shape=jax.ShapeDtypeStruct((S, B * D), x.dtype),
        grid_spec=pltpu.PrefetchScalarGridSpec(
            num_scalar_prefetch=0,
            grid=grid,
            in_specs=in_specs,
            out_specs=pl.BlockSpec((tS, B * D), lambda i: (i, 0)),
        ),
        compiler_params=pltpu.CompilerParams(
            dimension_semantics=("parallel",)),         # seq tiles are independent work
    )(*inputs)
    return out2d.reshape(S, B, D)


if __name__ == "__main__":
    d_model = 32
    seq_len = 8
    batch = 2
    max_len = 64          # small max_len for the example (module default is 5000)

    key = jax.random.PRNGKey(0)
    x = jax.random.normal(key, (seq_len, batch, d_model), dtype=jnp.float32)

    pe = make_pe(d_model, max_len=max_len)

    # Eval-mode forward (dropout = identity) — matches the PyTorch module in .eval().
    y_eval = positional_encoding(x, pe, p=0.1, training=False)
    y_eval = jax.block_until_ready(y_eval)

    # Reference check for the eval path.
    y_ref = x + pe[:seq_len][:, None, :]
    assert jnp.allclose(y_eval, y_ref, atol=1e-6), "mismatch vs reference"

    # Training-mode forward (inverted dropout with a wrapper-generated keep mask).
    y_train = positional_encoding(x, pe, p=0.1, training=True,
                                  rng_key=jax.random.PRNGKey(123))
    y_train = jax.block_until_ready(y_train)
    assert y_train.shape == (seq_len, batch, d_model)
    assert bool(jnp.all(jnp.isfinite(y_train)))

    print("KERNEL_OK")
</pallas_src>

<mosaic_0001>
module attributes {stable_mosaic.version = 11 : i64} {
  func.func @_posenc_kernel(%arg0: i32, %arg1: memref<8x64xf32, #tpu.memory_space<vmem>>, %arg2: memref<8x32xf32, #tpu.memory_space<vmem>>, %arg3: memref<8x64xf32, #tpu.memory_space<vmem>>) attributes {dimension_semantics = [#tpu.dimension_semantics<parallel>], iteration_bounds = array<i64: 1>, scalar_prefetch = 0 : i64, scratch_operands = 0 : i64, tpu.core_type = #tpu.core_type<tc>, window_params = [{transform_indices = @transform_0, window_bounds = array<i64: 8, 64>}, {transform_indices = @transform_1, window_bounds = array<i64: 8, 32>}, {transform_indices = @transform_2, window_bounds = array<i64: 8, 64>}]} {
    %c0 = arith.constant 0 : index
    %c0_0 = arith.constant 0 : index
    %0 = vector.load %arg2[%c0, %c0_0] : memref<8x32xf32, #tpu.memory_space<vmem>>, vector<8x32xf32>
    %1 = tpu.concatenate %0, %0 in 1 : vector<8x32xf32>, vector<8x32xf32> -> vector<8x64xf32>
    %c0_1 = arith.constant 0 : index
    %c0_2 = arith.constant 0 : index
    %2 = vector.load %arg1[%c0_1, %c0_2] : memref<8x64xf32, #tpu.memory_space<vmem>>, vector<8x64xf32>
    %3 = arith.addf %2, %1 : vector<8x64xf32>
    %c0_3 = arith.constant 0 : index
    %c0_4 = arith.constant 0 : index
    %4 = vector.load %arg3[%c0_3, %c0_4] : memref<8x64xf32, #tpu.memory_space<vmem>>, vector<8x64xf32>
    tpu.vector_store %arg3[%c0_3, %c0_4], %3 {strides = array<i32>} : memref<8x64xf32, #tpu.memory_space<vmem>>, vector<8x64xf32>,
    return
  }
  func.func @transform_0(%arg0: i32) -> (i32, i32) {
    %c0_i32 = arith.constant 0 : i32
    %c0_i32_0 = arith.constant 0 : i32
    return %arg0, %c0_i32 : i32, i32
  }
  func.func @transform_1(%arg0: i32) -> (i32, i32) {
    %c0_i32 = arith.constant 0 : i32
    %c0_i32_0 = arith.constant 0 : i32
    return %arg0, %c0_i32 : i32, i32
  }
  func.func @transform_2(%arg0: i32) -> (i32, i32) {
    %c0_i32 = arith.constant 0 : i32
    %c0_i32_0 = arith.constant 0 : i32
    return %arg0, %c0_i32 : i32, i32
  }
}

</mosaic_0001>

<llo_original>
// kernel: tpu_custom_call.1
$region0: #{tpu_custom_call.1}
  #allocation0 [shape = 'u32[]', space=smem, size = 0x4, offset = 0x4, fixed_abs, tag = 'smem constant byte address 0x4 - core index']
  #allocation1 [shape = 'u32[72,128]{1,0:T(1,128)}', space=vmem, size = 0x9000, scoped, tag = 'internal scratch']
  %s0 = inlined_call_operand.hbm [shape: f32[8,64], index: 0, kind: input, shape index: {}]
  %s1 = inlined_call_operand.hbm [shape: f32[8,32], index: 1, kind: input, shape index: {}]
  %s2 = inlined_call_operand.hbm [shape: f32[8,64], index: 2, kind: output, shape index: {}]
  %s3 = sld [smem:[#allocation0]]
  $region26: #{tpu_custom_call.1} parent=0
    _
  %s5 = ssub.s32 1, %s3
  %s6 = scalar_select 0, %s5, %s3
  $region1: #{tpu_custom_call.1} parent=0
    #allocation2 [shape = 'u8[4096]{0}', space=vmem, size = 0x1000, scoped, tag = 'input window, operand 0, single buffered']
    #allocation3 [shape = 's32[1]{0}', space=sflag, size = 0x4, scoped, tag = 'scoped memory for tpu_custom_call.1']
    #allocation4 [shape = 's32[1]{0}', space=sflag, size = 0x4, scoped, tag = 'scoped memory for tpu_custom_call.1']
    #allocation5 [shape = 'u8[4096]{0}', space=vmem, size = 0x1000, scoped, tag = 'input window, operand 1, single buffered']
    #allocation6 [shape = 's32[1]{0}', space=sflag, size = 0x4, scoped, tag = 'scoped memory for tpu_custom_call.1']
    #allocation7 [shape = 'u8[4096]{0}', space=vmem, size = 0x1000, scoped, tag = 'output window, operand 0, single buffered']
    %7 = vsyncpa [#allocation3], 0
    %8 = vsyncpa [#allocation6], 0
    %9 = vsyncpa [#allocation4], 0
    // Predicated region
    $region2: #{tpu_custom_call.1} parent=1 // pred_check
      _
    $region3: #{tpu_custom_call.1} parent=1 // pred_check_branch
      %11 = sbr.rel (0) target = $region5
    $region4: #{tpu_custom_call.1} parent=1 // pred_region
      %13 = vsyncadd [#allocation3], 0
      %s15 = sshll.u32 %s0, 4
      %s16 = int_to_ptr.hbm [resolvable:$true] %s15
      %s17 = sshll.u32 [#allocation2], 4
      %s18 = int_to_ptr.vmem [resolvable:$true] %s17
      %20 = dma.hbm_to_vmem [thread:$0]  %s16, 128, %s18, [#allocation3]
    $region5: #{tpu_custom_call.1} parent=1 // pred_fallthru
      _
    // Predicated region
    $region6: #{tpu_custom_call.1} parent=1 // pred_check
      _
    $region7: #{tpu_custom_call.1} parent=1 // pred_check_branch
      %22 = sbr.rel (0) target = $region9
    $region8: #{tpu_custom_call.1} parent=1 // pred_region
      %24 = vsyncadd [#allocation6], 0
      %s26 = sshll.u32 %s1, 4
      %s27 = int_to_ptr.hbm [resolvable:$true] %s26
      %s28 = sshll.u32 [#allocation5], 4
      %s29 = int_to_ptr.vmem [resolvable:$true] %s28
      %31 = dma.hbm_to_vmem [thread:$0]  %s27, 128, %s29, [#allocation6]
    $region9: #{tpu_custom_call.1} parent=1 // pred_fallthru
      _
    // Predicated region
    $region10: #{tpu_custom_call.1} parent=1 // pred_check
      _
    $region11: #{tpu_custom_call.1} parent=1 // pred_check_branch
      %33 = sbr.rel (0) target = $region13
    $region12: #{tpu_custom_call.1} parent=1 // pred_region
      %35 = dma.done [#allocation3], 128
    $region13: #{tpu_custom_call.1} parent=1 // pred_fallthru
      _
    // Predicated region
    $region14: #{tpu_custom_call.1} parent=1 // pred_check
      _
    $region15: #{tpu_custom_call.1} parent=1 // pred_check_branch
      %37 = sbr.rel (0) target = $region17
    $region16: #{tpu_custom_call.1} parent=1 // pred_region
      %39 = dma.done [#allocation6], 128
    $region17: #{tpu_custom_call.1} parent=1 // pred_fallthru
      _
    %v40 = vld [vmem:[#allocation5] sm:$0xff]
    %42 = vrot.lane.b32.xlu0 %v40, 32
    %v43 = vpop.permute.xlu0 %42
    %vm45 = vcmask 261120
    %v46 = vsel %vm45, %v40, %v43
    %v47 = vld [vmem:[#allocation2] sm:$0xff]
    %v48 = vadd.f32 %v47, %v46
    %vm49 = vcmask 523264
    %50 = vst.msk [vmem:[#allocation7] sm:$0xff] %vm49, %v48
    // Predicated region
    $region18: #{tpu_custom_call.1} parent=1 // pred_check
      _
    $region19: #{tpu_custom_call.1} parent=1 // pred_check_branch
      %52 = sbr.rel (0) target = $region21
    $region20: #{tpu_custom_call.1} parent=1 // pred_region
      %54 = vsyncadd [#allocation4], 0
      %s56 = sshll.u32 [#allocation7], 4
      %s57 = int_to_ptr.vmem [resolvable:$true] %s56
      %s58 = sshll.u32 %s2, 4
      %s59 = int_to_ptr.hbm [resolvable:$true] %s58
      %61 = dma.vmem_to_hbm [thread:$0]  %s57, 128, %s59, [#allocation4]
    $region21: #{tpu_custom_call.1} parent=1 // pred_fallthru
      _
    // Predicated region
    $region22: #{tpu_custom_call.1} parent=1 // pred_check
      _
    $region23: #{tpu_custom_call.1} parent=1 // pred_check_branch
      %63 = sbr.rel (0) target = $region25
    $region24: #{tpu_custom_call.1} parent=1 // pred_region
      %65 = dma.done [#allocation4], 128
    $region25: #{tpu_custom_call.1} parent=1 // pred_fallthru
      _
    %66 = vsyncpa [#allocation3], 1
    %67 = vsyncpa [#allocation6], 1
    %68 = vsyncpa [#allocation4], 1

</llo_original>
